<compile_context>
chip_gen: v7x
topology: tpu7x:2x2x1
jax: 0.10.0
libtpu: 0.0.40
codegen_flags: <defaults>
</compile_context>

<pallas_src>
import jax
import jax.numpy as jnp
from jax.experimental import pallas as pl
from jax.experimental.pallas import tpu as pltpu

_LANES = 128            # vreg lane width (fast axis)
_MAX_BLOCK_ROWS = 512   # 512 x 128 x 4 B = 256 KiB per block per operand


def _noise_add_kernel(x_ref, n_ref, o_ref):
    # o = x + (n - 0.5) / 10   -- whole-tile fused shift/scale/add (VPU only)
    o_ref[...] = x_ref[...] + (n_ref[...] - 0.5) / 10.0


def _round_up(a, m):
    return -(-a // m) * m


def add_gaussian_noise(x, key):
    """x + (randn_like(x) - 0.5) / 10, computed in a Pallas TPU kernel."""
    orig_shape = x.shape
    orig_dtype = x.dtype
    n = x.size

    # Standard-normal noise, same distribution as torch.randn(x.size()).
    noise = jax.random.normal(key, orig_shape, jnp.float32)

    # Flatten to a lane-dense (rows, 128) layout; pad the tail.
    rows = _round_up(max(-(-n // _LANES), 1), 8)      # sublane-aligned
    block_rows = min(_MAX_BLOCK_ROWS, rows)
    rows = _round_up(rows, block_rows)                # whole number of blocks
    padded = rows * _LANES

    xf = jnp.pad(x.reshape(-1).astype(jnp.float32),
                 (0, padded - n)).reshape(rows, _LANES)
    nf = jnp.pad(noise.reshape(-1), (0, padded - n)).reshape(rows, _LANES)

    out = pl.pallas_call(
        _noise_add_kernel,
        out_shape=jax.ShapeDtypeStruct((rows, _LANES), jnp.float32),
        grid=(rows // block_rows,),
        in_specs=[
            pl.BlockSpec((block_rows, _LANES), lambda i: (i, 0)),
            pl.BlockSpec((block_rows, _LANES), lambda i: (i, 0)),
        ],
        out_specs=pl.BlockSpec((block_rows, _LANES), lambda i: (i, 0)),
        compiler_params=pltpu.CompilerParams(
            dimension_semantics=("parallel",)),
    )(xf, nf)

    return out.reshape(-1)[:n].reshape(orig_shape).astype(orig_dtype)


class GaussianNoiseLayer:
    """Mirror of the PyTorch module: identity in eval, additive noise in train."""

    def __init__(self):
        self.training = True

    def __call__(self, x, key):
        if self.training is False:       # matches `if self.training == False`
            return x
        return add_gaussian_noise(x, key)


if __name__ == "__main__":
    key = jax.random.PRNGKey(0)
    xkey, nkey = jax.random.split(key)

    # Small input consistent with the module: NCHW feature map.
    x = jax.random.normal(xkey, (2, 4, 16, 16), jnp.float32)

    layer = GaussianNoiseLayer()

    # Training mode: x + (randn - 0.5) / 10
    out = jax.block_until_ready(layer(x, nkey))
    assert out.shape == x.shape and out.dtype == x.dtype

    # Plain-JAX reference check (same key -> same noise).
    ref = x + (jax.random.normal(nkey, x.shape, jnp.float32) - 0.5) / 10.0
    max_err = float(jnp.max(jnp.abs(out - ref)))
    assert jnp.allclose(out, ref, atol=1e-5, rtol=1e-5), max_err

    # Eval mode: identity.
    layer.training = False
    out_eval = jax.block_until_ready(layer(x, nkey))
    assert jnp.array_equal(out_eval, x)

    print("KERNEL_OK")
</pallas_src>

<mosaic_0001>
module attributes {stable_mosaic.version = 11 : i64} {
  func.func @_noise_add_kernel(%arg0: i32, %arg1: memref<16x128xf32, #tpu.memory_space<vmem>>, %arg2: memref<16x128xf32, #tpu.memory_space<vmem>>, %arg3: memref<16x128xf32, #tpu.memory_space<vmem>>) attributes {dimension_semantics = [#tpu.dimension_semantics<parallel>], iteration_bounds = array<i64: 1>, scalar_prefetch = 0 : i64, scratch_operands = 0 : i64, tpu.core_type = #tpu.core_type<tc>, window_params = [{transform_indices = @transform_0, window_bounds = array<i64: 16, 128>}, {transform_indices = @transform_1, window_bounds = array<i64: 16, 128>}, {transform_indices = @transform_2, window_bounds = array<i64: 16, 128>}]} {
    %c0 = arith.constant 0 : index
    %c0_0 = arith.constant 0 : index
    %0 = vector.load %arg1[%c0, %c0_0] : memref<16x128xf32, #tpu.memory_space<vmem>>, vector<16x128xf32>
    %c0_1 = arith.constant 0 : index
    %c0_2 = arith.constant 0 : index
    %1 = vector.load %arg2[%c0_1, %c0_2] : memref<16x128xf32, #tpu.memory_space<vmem>>, vector<16x128xf32>
    %cst = arith.constant 5.000000e-01 : f32
    %2 = vector.broadcast %cst : f32 to vector<16x128xf32>
    %3 = arith.subf %1, %2 : vector<16x128xf32>
    %cst_3 = arith.constant 1.000000e+01 : f32
    %4 = vector.broadcast %cst_3 : f32 to vector<16x128xf32>
    %5 = arith.divf %3, %4 : vector<16x128xf32>
    %6 = arith.addf %0, %5 : vector<16x128xf32>
    %c0_4 = arith.constant 0 : index
    %c0_5 = arith.constant 0 : index
    %7 = vector.load %arg3[%c0_4, %c0_5] : memref<16x128xf32, #tpu.memory_space<vmem>>, vector<16x128xf32>
    tpu.vector_store %arg3[%c0_4, %c0_5], %6 {strides = array<i32>} : memref<16x128xf32, #tpu.memory_space<vmem>>, vector<16x128xf32>,
    return
  }
  func.func @transform_0(%arg0: i32) -> (i32, i32) {
    %c0_i32 = arith.constant 0 : i32
    %c0_i32_0 = arith.constant 0 : i32
    return %arg0, %c0_i32 : i32, i32
  }
  func.func @transform_1(%arg0: i32) -> (i32, i32) {
    %c0_i32 = arith.constant 0 : i32
    %c0_i32_0 = arith.constant 0 : i32
    return %arg0, %c0_i32 : i32, i32
  }
  func.func @transform_2(%arg0: i32) -> (i32, i32) {
    %c0_i32 = arith.constant 0 : i32
    %c0_i32_0 = arith.constant 0 : i32
    return %arg0, %c0_i32 : i32, i32
  }
}

</mosaic_0001>

<llo_original>
// kernel: tpu_custom_call.1
$region0: #{tpu_custom_call.1}
  #allocation0 [shape = 'u32[]', space=smem, size = 0x4, offset = 0x4, fixed_abs, tag = 'smem constant byte address 0x4 - core index']
  #allocation1 [shape = 'u32[144,128]{1,0:T(1,128)}', space=vmem, size = 0x12000, scoped, tag = 'internal scratch']
  %s0 = inlined_call_operand.hbm [shape: f32[16,128], index: 0, kind: input, shape index: {}]
  %s1 = inlined_call_operand.hbm [shape: f32[16,128], index: 1, kind: input, shape index: {}]
  %s2 = inlined_call_operand.hbm [shape: f32[16,128], index: 2, kind: output, shape index: {}]
  %s3 = sld [smem:[#allocation0]]
  $region26: #{tpu_custom_call.1} parent=0
    _
  %s5 = ssub.s32 1, %s3
  %s6 = scalar_select 0, %s5, %s3
  $region1: #{tpu_custom_call.1} parent=0
    #allocation2 [shape = 'u8[8192]{0}', space=vmem, size = 0x2000, scoped, tag = 'input window, operand 0, single buffered']
    #allocation3 [shape = 's32[1]{0}', space=sflag, size = 0x4, scoped, tag = 'scoped memory for tpu_custom_call.1']
    #allocation4 [shape = 's32[1]{0}', space=sflag, size = 0x4, scoped, tag = 'scoped memory for tpu_custom_call.1']
    #allocation5 [shape = 'u8[8192]{0}', space=vmem, size = 0x2000, scoped, tag = 'input window, operand 1, single buffered']
    #allocation6 [shape = 's32[1]{0}', space=sflag, size = 0x4, scoped, tag = 'scoped memory for tpu_custom_call.1']
    #allocation7 [shape = 'u8[8192]{0}', space=vmem, size = 0x2000, scoped, tag = 'output window, operand 0, single buffered']
    %7 = vsyncpa [#allocation3], 0
    %8 = vsyncpa [#allocation6], 0
    %9 = vsyncpa [#allocation4], 0
    // Predicated region
    $region2: #{tpu_custom_call.1} parent=1 // pred_check
      _
    $region3: #{tpu_custom_call.1} parent=1 // pred_check_branch
      %11 = sbr.rel (0) target = $region5
    $region4: #{tpu_custom_call.1} parent=1 // pred_region
      %s13 = ssub.s32 256, 256
      %14 = vsyncadd [#allocation3], %s13
      %s15 = sshll.u32 [#allocation2], 4
      %s16 = int_to_ptr.vmem [resolvable:$true] %s15
      %21 = dma.hbm_to_vmem [thread:$0]  %s0, 256, %s16, [#allocation3], 128, 128, 8
    $region5: #{tpu_custom_call.1} parent=1 // pred_fallthru
      _
    // Predicated region
    $region6: #{tpu_custom_call.1} parent=1 // pred_check
      _
    $region7: #{tpu_custom_call.1} parent=1 // pred_check_branch
      %23 = sbr.rel (0) target = $region9
    $region8: #{tpu_custom_call.1} parent=1 // pred_region
      %s25 = ssub.s32 256, 256
      %26 = vsyncadd [#allocation6], %s25
      %s27 = sshll.u32 [#allocation5], 4
      %s28 = int_to_ptr.vmem [resolvable:$true] %s27
      %33 = dma.hbm_to_vmem [thread:$0]  %s1, 256, %s28, [#allocation6], 128, 128, 8
    $region9: #{tpu_custom_call.1} parent=1 // pred_fallthru
      _
    // Predicated region
    $region10: #{tpu_custom_call.1} parent=1 // pred_check
      _
    $region11: #{tpu_custom_call.1} parent=1 // pred_check_branch
      %35 = sbr.rel (0) target = $region13
    $region12: #{tpu_custom_call.1} parent=1 // pred_region
      %36 = dma.done [#allocation3], 256
    $region13: #{tpu_custom_call.1} parent=1 // pred_fallthru
      _
    // Predicated region
    $region14: #{tpu_custom_call.1} parent=1 // pred_check
      _
    $region15: #{tpu_custom_call.1} parent=1 // pred_check_branch
      %38 = sbr.rel (0) target = $region17
    $region16: #{tpu_custom_call.1} parent=1 // pred_region
      %39 = dma.done [#allocation6], 256
    $region17: #{tpu_custom_call.1} parent=1 // pred_fallthru
      _
    %v40 = vld [vmem:[#allocation2] sm:$0xff]
    %v41 = vld [vmem:[#allocation2 + $0x8] sm:$0xff]
    %v42 = vld [vmem:[#allocation5] sm:$0xff]
    %v43 = vld [vmem:[#allocation5 + $0x8] sm:$0xff]
    %v44 = vsub.f32 %v42, 0.5
    %v45 = vsub.f32 %v43, 0.5
    %v46 = vrcp.pop 10.0
    %v47 = vmul.f32 %v44, %v46
    %v48 = vmul.f32 %v45, %v46
    %v49 = vadd.f32 %v40, %v47
    %v50 = vadd.f32 %v41, %v48
    %51 = vst [vmem:[#allocation7] sm:$0xff] %v49
    %52 = vst [vmem:[#allocation7 + $0x8] sm:$0xff] %v50
    // Predicated region
    $region18: #{tpu_custom_call.1} parent=1 // pred_check
      _
    $region19: #{tpu_custom_call.1} parent=1 // pred_check_branch
      %54 = sbr.rel (0) target = $region21
    $region20: #{tpu_custom_call.1} parent=1 // pred_region
      %s56 = ssub.s32 256, 256
      %57 = vsyncadd [#allocation4], %s56
      %s58 = sshll.u32 [#allocation7], 4
      %s59 = int_to_ptr.vmem [resolvable:$true] %s58
      %64 = dma.vmem_to_hbm [thread:$0]  %s59, 256, %s2, [#allocation4], 128, 128, 8
    $region21: #{tpu_custom_call.1} parent=1 // pred_fallthru
      _
    // Predicated region
    $region22: #{tpu_custom_call.1} parent=1 // pred_check
      _
    $region23: #{tpu_custom_call.1} parent=1 // pred_check_branch
      %66 = sbr.rel (0) target = $region25
    $region24: #{tpu_custom_call.1} parent=1 // pred_region
      %67 = dma.done [#allocation4], 256
    $region25: #{tpu_custom_call.1} parent=1 // pred_fallthru
      _
    %68 = vsyncpa [#allocation3], 1
    %69 = vsyncpa [#allocation6], 1
    %70 = vsyncpa [#allocation4], 1

</llo_original>
